<compile_context>
chip_gen: v5e
topology: v5e:2x2
jax: 0.10.0
libtpu: 0.0.40
codegen_flags: <defaults>
</compile_context>

<pallas_src>
import jax
import jax.numpy as jnp
from jax.experimental import pallas as pl
from jax.experimental.pallas import tpu as pltpu


def _copy_block_kernel(x_ref, o_ref):
    # Identical in/out blocks -> unmasked aligned stores except the last
    # partial tile along each axis.
    o_ref[...] = x_ref[...]


def _round_up(x: int, m: int) -> int:
    return ((x + m - 1) // m) * m


def chomp1d(x: jax.Array, chomp_size: int) -> jax.Array:
    """Pallas equivalent of Chomp1d(chomp_size).forward(x) for x of shape (N, C, L)."""
    if x.ndim != 3:
        raise ValueError(f"expected (N, C, L), got shape {x.shape}")
    n, c, l = x.shape
    if chomp_size < 0 or chomp_size >= l:
        raise ValueError(f"chomp_size must be in [0, L); got {chomp_size}, L={l}")
    if chomp_size == 0:
        # TCN always uses chomp_size == padding > 0; treat 0 as identity.
        # (PyTorch's `x[:, :, :-0]` is a degenerate empty slice — a quirk.)
        return x

    l_out = l - chomp_size
    rows = n * c

    # Flatten batch*channels into one row axis (free reshape, row-major).
    x2 = x.reshape(rows, l)

    itemsize = jnp.dtype(x.dtype).itemsize
    sublane = max(8, 32 // max(itemsize, 1))       # 8 f32 / 16 bf16 / 32 int8
    row_tile = min(256, _round_up(rows, sublane))  # multiple of sublane packing
    lane_tile = min(1024, _round_up(l_out, 128))   # multiple of 128 lanes

    grid = (pl.cdiv(rows, row_tile), pl.cdiv(l_out, lane_tile))

    # Same block shape + index_map for input and output: output block (i, j)
    # starts at the same element offset as input block (i, j) because the
    # chomp only drops *trailing* length positions.
    block = (row_tile, lane_tile)
    idx = lambda i, j: (i, j)

    bytes_accessed = 2 * rows * l_out * itemsize   # one HBM read + one write

    out2 = pl.pallas_call(
        _copy_block_kernel,
        out_shape=jax.ShapeDtypeStruct((rows, l_out), x.dtype),
        grid_spec=pltpu.PrefetchScalarGridSpec(
            num_scalar_prefetch=0,
            grid=grid,
            in_specs=[pl.BlockSpec(block, idx)],
            out_specs=pl.BlockSpec(block, idx),
        ),
        compiler_params=pltpu.CompilerParams(
            dimension_semantics=("parallel", "parallel"),
            vmem_limit_bytes=32 * 1024 * 1024,
        ),
        cost_estimate=pl.CostEstimate(
            flops=0, transcendentals=0, bytes_accessed=bytes_accessed),
    )(x2)

    return out2.reshape(n, c, l_out)


if __name__ == "__main__":
    key = jax.random.PRNGKey(0)
    batch, channels, length = 2, 4, 16
    chomp_size = 3

    x = jax.random.normal(key, (batch, channels, length), dtype=jnp.float32)

    y = chomp1d(x, chomp_size)
    y = jax.block_until_ready(y)

    # Reference: plain slicing (what Chomp1d.forward does).
    y_ref = x[:, :, :length - chomp_size]

    assert y.shape == (batch, channels, length - chomp_size), y.shape
    assert y.dtype == x.dtype
    assert jnp.array_equal(y, y_ref), "mismatch vs reference slice"

    print("KERNEL_OK")
</pallas_src>

<mosaic_0001>
module attributes {stable_mosaic.version = 11 : i64} {
  func.func @_copy_block_kernel(%arg0: i32, %arg1: i32, %arg2: memref<8x128xf32, #tpu.memory_space<vmem>>, %arg3: memref<8x128xf32, #tpu.memory_space<vmem>>) attributes {dimension_semantics = [#tpu.dimension_semantics<parallel>, #tpu.dimension_semantics<parallel>], iteration_bounds = array<i64: 1, 1>, scalar_prefetch = 0 : i64, scratch_operands = 0 : i64, tpu.core_type = #tpu.core_type<tc>, window_params = [{transform_indices = @transform_0, window_bounds = array<i64: 8, 128>}, {transform_indices = @transform_1, window_bounds = array<i64: 8, 128>}]} {
    %c0 = arith.constant 0 : index
    %c0_0 = arith.constant 0 : index
    %0 = vector.load %arg2[%c0, %c0_0] : memref<8x128xf32, #tpu.memory_space<vmem>>, vector<8x128xf32>
    %c0_1 = arith.constant 0 : index
    %c0_2 = arith.constant 0 : index
    %1 = vector.load %arg3[%c0_1, %c0_2] : memref<8x128xf32, #tpu.memory_space<vmem>>, vector<8x128xf32>
    tpu.vector_store %arg3[%c0_1, %c0_2], %0 {strides = array<i32>} : memref<8x128xf32, #tpu.memory_space<vmem>>, vector<8x128xf32>,
    return
  }
  func.func @transform_0(%arg0: i32, %arg1: i32) -> (i32, i32) {
    %c0_i32 = arith.constant 0 : i32
    return %arg0, %arg1 : i32, i32
  }
  func.func @transform_1(%arg0: i32, %arg1: i32) -> (i32, i32) {
    %c0_i32 = arith.constant 0 : i32
    return %arg0, %arg1 : i32, i32
  }
}

</mosaic_0001>

<llo_original>
// kernel: tpu_custom_call.1
$region0: #{tpu_custom_call.1}
  #allocation0 [shape = 'u32[]', space=smem, size = 0x4, offset = 0x4, fixed_abs, tag = 'smem constant byte address 0x4 - core index']
  #allocation1 [shape = 'u32[72,128]{1,0:T(1,128)}', space=vmem, size = 0x9000, scoped, tag = 'internal scratch']
  %s0 = inlined_call_operand.hbm [shape: f32[8,16], index: 0, kind: input, shape index: {}]
  %s1 = inlined_call_operand.hbm [shape: f32[8,13], index: 1, kind: output, shape index: {}]
  %s2 = sld [smem:[#allocation0]]
  $region18: #{tpu_custom_call.1} parent=0
    _
  %s4 = ssub.s32 1, %s2
  %s5 = scalar_select 0, %s4, %s2
  $region1: #{tpu_custom_call.1} parent=0
    #allocation2 [shape = 'u8[4096]{0}', space=vmem, size = 0x1000, scoped, tag = 'input window, operand 0, single buffered']
    #allocation3 [shape = 's32[1]{0}', space=sflag, size = 0x4, scoped, tag = 'scoped memory for tpu_custom_call.1']
    #allocation4 [shape = 's32[1]{0}', space=sflag, size = 0x4, scoped, tag = 'scoped memory for tpu_custom_call.1']
    #allocation5 [shape = 'u8[4096]{0}', space=vmem, size = 0x1000, scoped, tag = 'output window, operand 0, single buffered']
    %6 = vsyncpa [#allocation3], 0
    %7 = vsyncpa [#allocation4], 0
    // Predicated region
    $region2: #{tpu_custom_call.1} parent=1 // pred_check
      _
    $region3: #{tpu_custom_call.1} parent=1 // pred_check_branch
      %9 = sbr.rel (0) target = $region5
    $region4: #{tpu_custom_call.1} parent=1 // pred_region
      %11 = vsyncadd [#allocation3], 0
      %s13 = sshll.u32 %s0, 4
      %s14 = int_to_ptr.hbm [resolvable:$true] %s13
      %s15 = sshll.u32 [#allocation2], 4
      %s16 = int_to_ptr.vmem [resolvable:$true] %s15
      %18 = dma.hbm_to_vmem [thread:$0]  %s14, 128, %s16, [#allocation3]
    $region5: #{tpu_custom_call.1} parent=1 // pred_fallthru
      _
    // Predicated region
    $region6: #{tpu_custom_call.1} parent=1 // pred_check
      _
    $region7: #{tpu_custom_call.1} parent=1 // pred_check_branch
      %20 = sbr.rel (0) target = $region9
    $region8: #{tpu_custom_call.1} parent=1 // pred_region
      %22 = dma.done [#allocation3], 128
    $region9: #{tpu_custom_call.1} parent=1 // pred_fallthru
      _
    %v23 = vld [vmem:[#allocation2] sm:$0xff]
    %24 = vst [vmem:[#allocation5] sm:$0xff] %v23
    // Predicated region
    $region10: #{tpu_custom_call.1} parent=1 // pred_check
      _
    $region11: #{tpu_custom_call.1} parent=1 // pred_check_branch
      %26 = sbr.rel (0) target = $region13
    $region12: #{tpu_custom_call.1} parent=1 // pred_region
      %28 = vsyncadd [#allocation4], 0
      %s30 = sshll.u32 [#allocation5], 4
      %s31 = int_to_ptr.vmem [resolvable:$true] %s30
      %s32 = sshll.u32 %s1, 4
      %s33 = int_to_ptr.hbm [resolvable:$true] %s32
      %35 = dma.vmem_to_hbm [thread:$0]  %s31, 128, %s33, [#allocation4]
    $region13: #{tpu_custom_call.1} parent=1 // pred_fallthru
      _
    // Predicated region
    $region14: #{tpu_custom_call.1} parent=1 // pred_check
      _
    $region15: #{tpu_custom_call.1} parent=1 // pred_check_branch
      %37 = sbr.rel (0) target = $region17
    $region16: #{tpu_custom_call.1} parent=1 // pred_region
      %39 = dma.done [#allocation4], 128
    $region17: #{tpu_custom_call.1} parent=1 // pred_fallthru
      _
    %40 = vsyncpa [#allocation3], 1
    %41 = vsyncpa [#allocation4], 1

</llo_original>
